<compile_context>
chip_gen: v7x
topology: tpu7x:2x2x1
jax: 0.10.0
libtpu: 0.0.40
codegen_flags: <defaults>
</compile_context>

<pallas_src>
import jax
import jax.numpy as jnp
from jax import lax
from jax.experimental import pallas as pl
from jax.experimental.pallas import tpu as pltpu


_LANE = 128
_SUBLANE = 8
_MAX_SB = 128          # up to 128*128 = 16K batch elements per tile (~650 KB f32 block)


def _round_up(x: int, m: int) -> int:
    return ((x + m - 1) // m) * m


def _make_ntd_kernel(tau: float, beta: float, batch_size: int):
    # Python floats / ints only -> inlined literals, nothing is captured as a constant.
    inv_tau = 1.0 / float(tau)
    beta_f = float(beta)
    neg_big = -1e30    # finite mask; exp(neg_big - finite) == +0.0 exactly in f32

    def kernel(x_ref, d_ref, t_ref, out_ref):
        p = pl.program_id(0)
        t = pl.program_id(1)

        @pl.when(t == 0)
        def _init():
            out_ref[...] = jnp.zeros_like(out_ref)

        num_classes = x_ref.shape[0]
        sb, lanes = t_ref.shape
        tgt = t_ref[...]                                        # (SB, 128) int32

        # Global batch index of every (sublane, lane) element of this tile.  Masks the
        # wrapper zero padding, the Pallas partial-block padding and clamped grid slots.
        blk = p * pl.num_programs(1) + t
        row = (blk * (sb * lanes)
               + lax.broadcasted_iota(jnp.int32, (sb, lanes), 0) * lanes
               + lax.broadcasted_iota(jnp.int32, (sb, lanes), 1))
        valid = row < batch_size

        def masked_scaled(vals, is_t):
            # not-true logits / tau: target class pushed to -1e30 (order preserving).
            return jnp.where(is_t, neg_big, vals * inv_tau)

        # ---- pass 1: per-sample maxima and the target-class logit (all dense VPU) ----
        m = m1 = m2 = x_tgt = None
        for c in range(num_classes):
            xc = x_ref[c].astype(jnp.float32)                   # (SB, 128)
            dc = d_ref[c].astype(jnp.float32)
            is_t = tgt == c
            ltc = masked_scaled(xc, is_t)
            dtc = masked_scaled(dc, is_t)
            if c == 0:
                m, m1, m2 = xc, ltc, dtc
                x_tgt = jnp.where(is_t, xc, 0.0)
            else:
                m = jnp.maximum(m, xc)
                m1 = jnp.maximum(m1, ltc)
                m2 = jnp.maximum(m2, dtc)
                x_tgt = jnp.where(is_t, xc, x_tgt)

        # ---- pass 2: exp sums (3 EUP exps per element, everything else VPU) ----------
        s = s1 = s2 = u = None
        for c in range(num_classes):
            xc = x_ref[c].astype(jnp.float32)
            dc = d_ref[c].astype(jnp.float32)
            is_t = tgt == c
            ltc = masked_scaled(xc, is_t)
            dtc = masked_scaled(dc, is_t)
            e0 = jnp.exp(xc - m)
            e1 = jnp.exp(ltc - m1)
            e2 = jnp.exp(dtc - m2)           # exactly 0 at the target class
            du = e2 * (dtc - ltc)            # target term: 0 * 0 == 0
            if c == 0:
                s, s1, s2, u = e0, e1, e2, du
            else:
                s, s1, s2, u = s + e0, s1 + e1, s2 + e2, u + du

        # ---- per-sample losses --------------------------------------------------------
        ce_lane = (jnp.log(s) + m) - x_tgt                      # -log_softmax(x)[target]
        ls1 = jnp.log(s1) + m1                                  # student not-true logZ
        ls2 = jnp.log(s2) + m2                                  # teacher not-true logZ
        kl_lane = u * pl.reciprocal(s2) + (ls1 - ls2)           # sum_c q*(log q - log p)

        contrib = jnp.where(valid, ce_lane + beta_f * kl_lane, 0.0)

        # Fold sublane groups into the lane-dense (8, 128) per-core accumulator.  The
        # only cross-lane reduction happens once, in the wrapper.
        part = None
        for r in range(sb // _SUBLANE):
            chunk = contrib[r * _SUBLANE:(r + 1) * _SUBLANE, :]
            part = chunk if part is None else part + chunk
        out_ref[...] = out_ref[...] + part

    return kernel


def ntd_loss(logits, targets, dg_logits, *, num_classes=10, tau=3.0, beta=1.0):
    """logits, dg_logits: [B, C] float (f32 or bf16); targets: [B] int. Returns scalar f32."""
    B, C = logits.shape
    assert C == num_classes
    assert dg_logits.shape == (B, C)
    assert targets.shape == (B,)

    # Pad the batch to whole (8, 128) tiles, then repack into the class-major dense
    # layout (C, B_pad//128, 128).  pad + transpose + reshape is one fused XLA relayout
    # and allow_input_fusion below lets XLA fold it into the pallas_call input reads.
    b_pad = _round_up(B, _SUBLANE * _LANE)
    nrows = b_pad // _LANE

    def to_class_major(a):
        if b_pad != B:
            a = jnp.pad(a, ((0, b_pad - B), (0, 0)))
        return jnp.transpose(a).reshape(C, nrows, _LANE)

    x3 = to_class_major(logits)
    d3 = to_class_major(dg_logits)
    t2 = jnp.pad(targets.astype(jnp.int32), (0, b_pad - B)).reshape(nrows, _LANE)

    # Tile the folded batch axis; aim for >= 2 tiles so v7x can split them across both
    # TensorCores, cap at 16K batch elements per tile.
    sb = min(_MAX_SB, _round_up(max(nrows // 2, 1), _SUBLANE), nrows)
    n_tiles = pl.cdiv(nrows, sb)
    n_cores = 2 if n_tiles >= 2 else 1
    steps = pl.cdiv(n_tiles, n_cores)
    last_tile = n_tiles - 1

    def tile_idx(p, t):
        # Clamp: trailing (empty) grid slots re-read the last tile; the kernel masks
        # them out via the global batch index, so they contribute exactly 0.
        return jnp.minimum(p * steps + t, last_tile)

    kernel = _make_ntd_kernel(tau, beta, B)

    itemsize = jnp.dtype(logits.dtype).itemsize
    cost = pl.CostEstimate(
        flops=int(60 * B * C),
        transcendentals=int(3 * B * C + 4 * B),
        bytes_accessed=int(2 * B * C * itemsize + 4 * B + 4),
    )

    out = pl.pallas_call(
        kernel,
        out_shape=jax.ShapeDtypeStruct((n_cores * _SUBLANE, _LANE), jnp.float32),
        grid=(n_cores, steps),
        in_specs=[
            pl.BlockSpec((C, sb, _LANE), lambda p, t: (0, tile_idx(p, t), 0)),
            pl.BlockSpec((C, sb, _LANE), lambda p, t: (0, tile_idx(p, t), 0)),
            pl.BlockSpec((sb, _LANE), lambda p, t: (tile_idx(p, t), 0)),
        ],
        out_specs=pl.BlockSpec((_SUBLANE, _LANE), lambda p, t: (p, 0)),
        compiler_params=pltpu.CompilerParams(
            dimension_semantics=("parallel", "arbitrary"),
            allow_input_fusion=[True, True, True],
        ),
        cost_estimate=cost,
    )(x3, d3, t2)

    # One tiny cross-lane reduction outside the kernel; the single 1/B covers both the
    # CE 'mean' and the KLDiv 'batchmean'.
    return jnp.sum(out) * (1.0 / B)


def _ntd_loss_ref(logits, targets, dg_logits, *, num_classes=10, tau=3.0, beta=1.0):
    """Pure-JAX reference mirroring the PyTorch forward (true column deletion)."""
    B, C = logits.shape
    onehot = jax.nn.one_hot(targets, C, dtype=bool)
    logits = logits.astype(jnp.float32)
    dg_logits = dg_logits.astype(jnp.float32)
    # Cross entropy
    logp = jax.nn.log_softmax(logits, axis=1)
    ce = -jnp.mean(jnp.sum(jnp.where(onehot, logp, 0.0), axis=1))
    # refine_as_not_true: delete target column, keep order
    nt_idx = jnp.argsort(onehot, axis=1, stable=True)[:, : C - 1]
    nt_idx = jnp.sort(nt_idx, axis=1)
    nt_logits = jnp.take_along_axis(logits, nt_idx, axis=1)
    nt_dg = jnp.take_along_axis(dg_logits, nt_idx, axis=1)
    p_log = jax.nn.log_softmax(nt_logits / tau, axis=1)
    q = jax.nn.softmax(nt_dg / tau, axis=1)
    kl = jnp.sum(q * (jnp.log(q) - p_log)) / B
    return ce + beta * kl


if __name__ == "__main__":
    key = jax.random.PRNGKey(0)
    k1, k2, k3, k4, k5, k6 = jax.random.split(key, 6)

    # Small shape consistent with the module defaults (num_classes=10).
    B, num_classes = 8, 10
    logits = jax.random.normal(k1, (B, num_classes), dtype=jnp.float32)
    dg_logits = jax.random.normal(k2, (B, num_classes), dtype=jnp.float32)
    targets = jax.random.randint(k3, (B,), 0, num_classes, dtype=jnp.int32)

    loss = ntd_loss(logits, targets, dg_logits,
                    num_classes=num_classes, tau=3.0, beta=1.0)
    jax.block_until_ready(loss)
    ref = _ntd_loss_ref(logits, targets, dg_logits,
                        num_classes=num_classes, tau=3.0, beta=1.0)
    assert jnp.allclose(loss, ref, atol=1e-5, rtol=1e-5), (loss, ref)

    # Second case: exercises batch padding, partial Pallas blocks and the 2-core grid.
    B2 = 3000
    logits2 = jax.random.normal(k4, (B2, num_classes), dtype=jnp.float32)
    dg_logits2 = jax.random.normal(k5, (B2, num_classes), dtype=jnp.float32)
    targets2 = jax.random.randint(k6, (B2,), 0, num_classes, dtype=jnp.int32)

    loss2 = ntd_loss(logits2, targets2, dg_logits2,
                     num_classes=num_classes, tau=3.0, beta=1.0)
    jax.block_until_ready(loss2)
    ref2 = _ntd_loss_ref(logits2, targets2, dg_logits2,
                         num_classes=num_classes, tau=3.0, beta=1.0)
    assert jnp.allclose(loss2, ref2, atol=1e-4, rtol=1e-4), (loss2, ref2)

    print("KERNEL_OK")
</pallas_src>

<mosaic_0001>
module attributes {stable_mosaic.version = 11 : i64} {
  func.func @kernel(%arg0: i32, %arg1: i32, %arg2: memref<10x8x128xf32, #tpu.memory_space<vmem>>, %arg3: memref<10x8x128xf32, #tpu.memory_space<vmem>>, %arg4: memref<8x128xi32, #tpu.memory_space<vmem>>, %arg5: memref<8x128xf32, #tpu.memory_space<vmem>>) attributes {dimension_semantics = [#tpu.dimension_semantics<parallel>, #tpu.dimension_semantics<arbitrary>], iteration_bounds = array<i64: 1, 1>, scalar_prefetch = 0 : i64, scratch_operands = 0 : i64, tpu.core_type = #tpu.core_type<tc>, window_params = [{transform_indices = @transform_0, window_bounds = array<i64: 10, 8, 128>}, {transform_indices = @transform_1, window_bounds = array<i64: 10, 8, 128>}, {transform_indices = @transform_2, window_bounds = array<i64: 8, 128>}, {transform_indices = @transform_3, window_bounds = array<i64: 8, 128>}]} {
    %c0_i32 = arith.constant 0 : i32
    %0 = arith.cmpi eq, %arg1, %c0_i32 : i32
    %1 = arith.extui %0 : i1 to i32
    %c0_i32_0 = arith.constant 0 : i32
    %2 = arith.cmpi ne, %1, %c0_i32_0 : i32
    scf.if %2 {
      %cst_212 = arith.constant 0.000000e+00 : f32
      %469 = vector.broadcast %cst_212 : f32 to vector<8x128xf32>
      %c0_213 = arith.constant 0 : index
      %c0_214 = arith.constant 0 : index
      %470 = vector.load %arg5[%c0_213, %c0_214] : memref<8x128xf32, #tpu.memory_space<vmem>>, vector<8x128xf32>
      tpu.vector_store %arg5[%c0_213, %c0_214], %469 {strides = array<i32>} : memref<8x128xf32, #tpu.memory_space<vmem>>, vector<8x128xf32>,
    } else {
    }
    %c0 = arith.constant 0 : index
    %c0_1 = arith.constant 0 : index
    %3 = vector.load %arg4[%c0, %c0_1] : memref<8x128xi32, #tpu.memory_space<vmem>>, vector<8x128xi32>
    %c1_i32 = arith.constant 1 : i32
    %4 = arith.muli %arg0, %c1_i32 : i32
    %5 = arith.addi %4, %arg1 : i32
    %c1024_i32 = arith.constant 1024 : i32
    %6 = arith.muli %5, %c1024_i32 : i32
    %7 = tpu.iota {dimensions = array<i32: 0>} : vector<8x128xi32>
    %c128_i32 = arith.constant 128 : i32
    %8 = vector.broadcast %c128_i32 : i32 to vector<8x128xi32>
    %9 = arith.muli %7, %8 : vector<8x128xi32>
    %10 = vector.broadcast %6 : i32 to vector<8x128xi32>
    %11 = arith.addi %10, %9 : vector<8x128xi32>
    %12 = tpu.iota {dimensions = array<i32: 1>} : vector<8x128xi32>
    %13 = arith.addi %11, %12 : vector<8x128xi32>
    %c8_i32 = arith.constant 8 : i32
    %14 = vector.broadcast %c8_i32 : i32 to vector<8x128xi32>
    %15 = arith.cmpi slt, %13, %14 : vector<8x128xi32>
    %c0_2 = arith.constant 0 : index
    %c0_3 = arith.constant 0 : index
    %c0_4 = arith.constant 0 : index
    %16 = vector.load %arg2[%c0_2, %c0_3, %c0_4] : memref<10x8x128xf32, #tpu.memory_space<vmem>>, vector<1x8x128xf32>
    %17 = vector.shape_cast %16 : vector<1x8x128xf32> to vector<8x128xf32>
    %c0_5 = arith.constant 0 : index
    %c0_6 = arith.constant 0 : index
    %c0_7 = arith.constant 0 : index
    %18 = vector.load %arg3[%c0_5, %c0_6, %c0_7] : memref<10x8x128xf32, #tpu.memory_space<vmem>>, vector<1x8x128xf32>
    %19 = vector.shape_cast %18 : vector<1x8x128xf32> to vector<8x128xf32>
    %c0_i32_8 = arith.constant 0 : i32
    %20 = vector.broadcast %c0_i32_8 : i32 to vector<8x128xi32>
    %21 = arith.cmpi eq, %3, %20 : vector<8x128xi32>
    %cst = arith.constant 0.333333343 : f32
    %22 = vector.broadcast %cst : f32 to vector<8x128xf32>
    %23 = arith.mulf %17, %22 : vector<8x128xf32>
    %cst_9 = arith.constant -1.000000e+30 : f32
    %24 = vector.broadcast %cst_9 : f32 to vector<8x128xf32>
    %25 = arith.select %21, %24, %23 : vector<8x128xi1>, vector<8x128xf32>
    %cst_10 = arith.constant 0.333333343 : f32
    %26 = vector.broadcast %cst_10 : f32 to vector<8x128xf32>
    %27 = arith.mulf %19, %26 : vector<8x128xf32>
    %cst_11 = arith.constant -1.000000e+30 : f32
    %28 = vector.broadcast %cst_11 : f32 to vector<8x128xf32>
    %29 = arith.select %21, %28, %27 : vector<8x128xi1>, vector<8x128xf32>
    %cst_12 = arith.constant 0.000000e+00 : f32
    %30 = vector.broadcast %cst_12 : f32 to vector<8x128xf32>
    %31 = arith.select %21, %17, %30 : vector<8x128xi1>, vector<8x128xf32>
    %c1 = arith.constant 1 : index
    %c0_13 = arith.constant 0 : index
    %c0_14 = arith.constant 0 : index
    %32 = vector.load %arg2[%c1, %c0_13, %c0_14] : memref<10x8x128xf32, #tpu.memory_space<vmem>>, vector<1x8x128xf32>
    %33 = vector.shape_cast %32 : vector<1x8x128xf32> to vector<8x128xf32>
    %c1_15 = arith.constant 1 : index
    %c0_16 = arith.constant 0 : index
    %c0_17 = arith.constant 0 : index
    %34 = vector.load %arg3[%c1_15, %c0_16, %c0_17] : memref<10x8x128xf32, #tpu.memory_space<vmem>>, vector<1x8x128xf32>
    %35 = vector.shape_cast %34 : vector<1x8x128xf32> to vector<8x128xf32>
    %c1_i32_18 = arith.constant 1 : i32
    %36 = vector.broadcast %c1_i32_18 : i32 to vector<8x128xi32>
    %37 = arith.cmpi eq, %3, %36 : vector<8x128xi32>
    %cst_19 = arith.constant 0.333333343 : f32
    %38 = vector.broadcast %cst_19 : f32 to vector<8x128xf32>
    %39 = arith.mulf %33, %38 : vector<8x128xf32>
    %cst_20 = arith.constant -1.000000e+30 : f32
    %40 = vector.broadcast %cst_20 : f32 to vector<8x128xf32>
    %41 = arith.select %37, %40, %39 : vector<8x128xi1>, vector<8x128xf32>
    %cst_21 = arith.constant 0.333333343 : f32
    %42 = vector.broadcast %cst_21 : f32 to vector<8x128xf32>
    %43 = arith.mulf %35, %42 : vector<8x128xf32>
    %cst_22 = arith.constant -1.000000e+30 : f32
    %44 = vector.broadcast %cst_22 : f32 to vector<8x128xf32>
    %45 = arith.select %37, %44, %43 : vector<8x128xi1>, vector<8x128xf32>
    %46 = arith.maximumf %17, %33 : vector<8x128xf32>
    %47 = arith.maximumf %25, %41 : vector<8x128xf32>
    %48 = arith.maximumf %29, %45 : vector<8x128xf32>
    %49 = arith.select %37, %33, %31 : vector<8x128xi1>, vector<8x128xf32>
    %c2 = arith.constant 2 : index
    %c0_23 = arith.constant 0 : index
    %c0_24 = arith.constant 0 : index
    %50 = vector.load %arg2[%c2, %c0_23, %c0_24] : memref<10x8x128xf32, #tpu.memory_space<vmem>>, vector<1x8x128xf32>
    %51 = vector.shape_cast %50 : vector<1x8x128xf32> to vector<8x128xf32>
    %c2_25 = arith.constant 2 : index
    %c0_26 = arith.constant 0 : index
    %c0_27 = arith.constant 0 : index
    %52 = vector.load %arg3[%c2_25, %c0_26, %c0_27] : memref<10x8x128xf32, #tpu.memory_space<vmem>>, vector<1x8x128xf32>
    %53 = vector.shape_cast %52 : vector<1x8x128xf32> to vector<8x128xf32>
    %c2_i32 = arith.constant 2 : i32
    %54 = vector.broadcast %c2_i32 : i32 to vector<8x128xi32>
    %55 = arith.cmpi eq, %3, %54 : vector<8x128xi32>
    %cst_28 = arith.constant 0.333333343 : f32
    %56 = vector.broadcast %cst_28 : f32 to vector<8x128xf32>
    %57 = arith.mulf %51, %56 : vector<8x128xf32>
    %cst_29 = arith.constant -1.000000e+30 : f32
    %58 = vector.broadcast %cst_29 : f32 to vector<8x128xf32>
    %59 = arith.select %55, %58, %57 : vector<8x128xi1>, vector<8x128xf32>
    %cst_30 = arith.constant 0.333333343 : f32
    %60 = vector.broadcast %cst_30 : f32 to vector<8x128xf32>
    %61 = arith.mulf %53, %60 : vector<8x128xf32>
    %cst_31 = arith.constant -1.000000e+30 : f32
    %62 = vector.broadcast %cst_31 : f32 to vector<8x128xf32>
    %63 = arith.select %55, %62, %61 : vector<8x128xi1>, vector<8x128xf32>
    %64 = arith.maximumf %46, %51 : vector<8x128xf32>
    %65 = arith.maximumf %47, %59 : vector<8x128xf32>
    %66 = arith.maximumf %48, %63 : vector<8x128xf32>
    %67 = arith.select %55, %51, %49 : vector<8x128xi1>, vector<8x128xf32>
    %c3 = arith.constant 3 : index
    %c0_32 = arith.constant 0 : index
    %c0_33 = arith.constant 0 : index
    %68 = vector.load %arg2[%c3, %c0_32, %c0_33] : memref<10x8x128xf32, #tpu.memory_space<vmem>>, vector<1x8x128xf32>
    %69 = vector.shape_cast %68 : vector<1x8x128xf32> to vector<8x128xf32>
    %c3_34 = arith.constant 3 : index
    %c0_35 = arith.constant 0 : index
    %c0_36 = arith.constant 0 : index
    %70 = vector.load %arg3[%c3_34, %c0_35, %c0_36] : memref<10x8x128xf32, #tpu.memory_space<vmem>>, vector<1x8x128xf32>
    %71 = vector.shape_cast %70 : vector<1x8x128xf32> to vector<8x128xf32>
    %c3_i32 = arith.constant 3 : i32
    %72 = vector.broadcast %c3_i32 : i32 to vector<8x128xi32>
    %73 = arith.cmpi eq, %3, %72 : vector<8x128xi32>
    %cst_37 = arith.constant 0.333333343 : f32
    %74 = vector.broadcast %cst_37 : f32 to vector<8x128xf32>
    %75 = arith.mulf %69, %74 : vector<8x128xf32>
    %cst_38 = arith.constant -1.000000e+30 : f32
    %76 = vector.broadcast %cst_38 : f32 to vector<8x128xf32>
    %77 = arith.select %73, %76, %75 : vector<8x128xi1>, vector<8x128xf32>
    %cst_39 = arith.constant 0.333333343 : f32
    %78 = vector.broadcast %cst_39 : f32 to vector<8x128xf32>
    %79 = arith.mulf %71, %78 : vector<8x128xf32>
    %cst_40 = arith.constant -1.000000e+30 : f32
    %80 = vector.broadcast %cst_40 : f32 to vector<8x128xf32>
    %81 = arith.select %73, %80, %79 : vector<8x128xi1>, vector<8x128xf32>
    %82 = arith.maximumf %64, %69 : vector<8x128xf32>
    %83 = arith.maximumf %65, %77 : vector<8x128xf32>
    %84 = arith.maximumf %66, %81 : vector<8x128xf32>
    %85 = arith.select %73, %69, %67 : vector<8x128xi1>, vector<8x128xf32>
    %c4 = arith.constant 4 : index
    %c0_41 = arith.constant 0 : index
    %c0_42 = arith.constant 0 : index
    %86 = vector.load %arg2[%c4, %c0_41, %c0_42] : memref<10x8x128xf32, #tpu.memory_space<vmem>>, vector<1x8x128xf32>
    %87 = vector.shape_cast %86 : vector<1x8x128xf32> to vector<8x128xf32>
    %c4_43 = arith.constant 4 : index
    %c0_44 = arith.constant 0 : index
    %c0_45 = arith.constant 0 : index
    %88 = vector.load %arg3[%c4_43, %c0_44, %c0_45] : memref<10x8x128xf32, #tpu.memory_space<vmem>>, vector<1x8x128xf32>
    %89 = vector.shape_cast %88 : vector<1x8x128xf32> to vector<8x128xf32>
    %c4_i32 = arith.constant 4 : i32
    %90 = vector.broadcast %c4_i32 : i32 to vector<8x128xi32>
    %91 = arith.cmpi eq, %3, %90 : vector<8x128xi32>
    %cst_46 = arith.constant 0.333333343 : f32
    %92 = vector.broadcast %cst_46 : f32 to vector<8x128xf32>
    %93 = arith.mulf %87, %92 : vector<8x128xf32>
    %cst_47 = arith.constant -1.000000e+30 : f32
    %94 = vector.broadcast %cst_47 : f32 to vector<8x128xf32>
    %95 = arith.select %91, %94, %93 : vector<8x128xi1>, vector<8x128xf32>
    %cst_48 = arith.constant 0.333333343 : f32
    %96 = vector.broadcast %cst_48 : f32 to vector<8x128xf32>
    %97 = arith.mulf %89, %96 : vector<8x128xf32>
    %cst_49 = arith.constant -1.000000e+30 : f32
    %98 = vector.broadcast %cst_49 : f32 to vector<8x128xf32>
    %99 = arith.select %91, %98, %97 : vector<8x128xi1>, vector<8x128xf32>
    %100 = arith.maximumf %82, %87 : vector<8x128xf32>
    %101 = arith.maximumf %83, %95 : vector<8x128xf32>
    %102 = arith.maximumf %84, %99 : vector<8x128xf32>
    %103 = arith.select %91, %87, %85 : vector<8x128xi1>, vector<8x128xf32>
    %c5 = arith.constant 5 : index
    %c0_50 = arith.constant 0 : index
    %c0_51 = arith.constant 0 : index
    %104 = vector.load %arg2[%c5, %c0_50, %c0_51] : memref<10x8x128xf32, #tpu.memory_space<vmem>>, vector<1x8x128xf32>
    %105 = vector.shape_cast %104 : vector<1x8x128xf32> to vector<8x128xf32>
    %c5_52 = arith.constant 5 : index
    %c0_53 = arith.constant 0 : index
    %c0_54 = arith.constant 0 : index
    %106 = vector.load %arg3[%c5_52, %c0_53, %c0_54] : memref<10x8x128xf32, #tpu.memory_space<vmem>>, vector<1x8x128xf32>
    %107 = vector.shape_cast %106 : vector<1x8x128xf32> to vector<8x128xf32>
    %c5_i32 = arith.constant 5 : i32
    %108 = vector.broadcast %c5_i32 : i32 to vector<8x128xi32>
    %109 = arith.cmpi eq, %3, %108 : vector<8x128xi32>
    %cst_55 = arith.constant 0.333333343 : f32
    %110 = vector.broadcast %cst_55 : f32 to vector<8x128xf32>
    %111 = arith.mulf %105, %110 : vector<8x128xf32>
    %cst_56 = arith.constant -1.000000e+30 : f32
    %112 = vector.broadcast %cst_56 : f32 to vector<8x128xf32>
    %113 = arith.select %109, %112, %111 : vector<8x128xi1>, vector<8x128xf32>
    %cst_57 = arith.constant 0.333333343 : f32
    %114 = vector.broadcast %cst_57 : f32 to vector<8x128xf32>
    %115 = arith.mulf %107, %114 : vector<8x128xf32>
    %cst_58 = arith.constant -1.000000e+30 : f32
    %116 = vector.broadcast %cst_58 : f32 to vector<8x128xf32>
    %117 = arith.select %109, %116, %115 : vector<8x128xi1>, vector<8x128xf32>
    %118 = arith.maximumf %100, %105 : vector<8x128xf32>
    %119 = arith.maximumf %101, %113 : vector<8x128xf32>
    %120 = arith.maximumf %102, %117 : vector<8x128xf32>
    %121 = arith.select %109, %105, %103 : vector<8x128xi1>, vector<8x128xf32>
    %c6 = arith.constant 6 : index
    %c0_59 = arith.constant 0 : index
    %c0_60 = arith.constant 0 : index
    %122 = vector.load %arg2[%c6, %c0_59, %c0_60] : memref<10x8x128xf32, #tpu.memory_space<vmem>>, vector<1x8x128xf32>
    %123 = vector.shape_cast %122 : vector<1x8x128xf32> to vector<8x128xf32>
    %c6_61 = arith.constant 6 : index
    %c0_62 = arith.constant 0 : index
    %c0_63 = arith.constant 0 : index
    %124 = vector.load %arg3[%c6_61, %c0_62, %c0_63] : memref<10x8x128xf32, #tpu.memory_space<vmem>>, vector<1x8x128xf32>
    %125 = vector.shape_cast %124 : vector<1x8x128xf32> to vector<8x128xf32>
    %c6_i32 = arith.constant 6 : i32
    %126 = vector.broadcast %c6_i32 : i32 to vector<8x128xi32>
    %127 = arith.cmpi eq, %3, %126 : vector<8x128xi32>
    %cst_64 = arith.constant 0.333333343 : f32
    %128 = vector.broadcast %cst_64 : f32 to vector<8x128xf32>
    %129 = arith.mulf %123, %128 : vector<8x128xf32>
    %cst_65 = arith.constant -1.000000e+30 : f32
    %130 = vector.broadcast %cst_65 : f32 to vector<8x128xf32>
    %131 = arith.select %127, %130, %129 : vector<8x128xi1>, vector<8x128xf32>
    %cst_66 = arith.constant 0.333333343 : f32
    %132 = vector.broadcast %cst_66 : f32 to vector<8x128xf32>
    %133 = arith.mulf %125, %132 : vector<8x128xf32>
    %cst_67 = arith.constant -1.000000e+30 : f32
    %134 = vector.broadcast %cst_67 : f32 to vector<8x128xf32>
    %135 = arith.select %127, %134, %133 : vector<8x128xi1>, vector<8x128xf32>
    %136 = arith.maximumf %118, %123 : vector<8x128xf32>
    %137 = arith.maximumf %119, %131 : vector<8x128xf32>
    %138 = arith.maximumf %120, %135 : vector<8x128xf32>
    %139 = arith.select %127, %123, %121 : vector<8x128xi1>, vector<8x128xf32>
    %c7 = arith.constant 7 : index
    %c0_68 = arith.constant 0 : index
    %c0_69 = arith.constant 0 : index
    %140 = vector.load %arg2[%c7, %c0_68, %c0_69] : memref<10x8x128xf32, #tpu.memory_space<vmem>>, vector<1x8x128xf32>
    %141 = vector.shape_cast %140 : vector<1x8x128xf32> to vector<8x128xf32>
    %c7_70 = arith.constant 7 : index
    %c0_71 = arith.constant 0 : index
    %c0_72 = arith.constant 0 : index
    %142 = vector.load %arg3[%c7_70, %c0_71, %c0_72] : memref<10x8x128xf32, #tpu.memory_space<vmem>>, vector<1x8x128xf32>
    %143 = vector.shape_cast %142 : vector<1x8x128xf32> to vector<8x128xf32>
    %c7_i32 = arith.constant 7 : i32
    %144 = vector.broadcast %c7_i32 : i32 to vector<8x128xi32>
    %145 = arith.cmpi eq, %3, %144 : vector<8x128xi32>
    %cst_73 = arith.constant 0.333333343 : f32
    %146 = vector.broadcast %cst_73 : f32 to vector<8x128xf32>
    %147 = arith.mulf %141, %146 : vector<8x128xf32>
    %cst_74 = arith.constant -1.000000e+30 : f32
    %148 = vector.broadcast %cst_74 : f32 to vector<8x128xf32>
    %149 = arith.select %145, %148, %147 : vector<8x128xi1>, vector<8x128xf32>
    %cst_75 = arith.constant 0.333333343 : f32
    %150 = vector.broadcast %cst_75 : f32 to vector<8x128xf32>
    %151 = arith.mulf %143, %150 : vector<8x128xf32>
    %cst_76 = arith.constant -1.000000e+30 : f32
    %152 = vector.broadcast %cst_76 : f32 to vector<8x128xf32>
    %153 = arith.select %145, %152, %151 : vector<8x128xi1>, vector<8x128xf32>
    %154 = arith.maximumf %136, %141 : vector<8x128xf32>
    %155 = arith.maximumf %137, %149 : vector<8x128xf32>
    %156 = arith.maximumf %138, %153 : vector<8x128xf32>
    %157 = arith.select %145, %141, %139 : vector<8x128xi1>, vector<8x128xf32>
    %c8 = arith.constant 8 : index
    %c0_77 = arith.constant 0 : index
    %c0_78 = arith.constant 0 : index
    %158 = vector.load %arg2[%c8, %c0_77, %c0_78] : memref<10x8x128xf32, #tpu.memory_space<vmem>>, vector<1x8x128xf32>
    %159 = vector.shape_cast %158 : vector<1x8x128xf32> to vector<8x128xf32>
    %c8_79 = arith.constant 8 : index
    %c0_80 = arith.constant 0 : index
    %c0_81 = arith.constant 0 : index
    %160 = vector.load %arg3[%c8_79, %c0_80, %c0_81] : memref<10x8x128xf32, #tpu.memory_space<vmem>>, vector<1x8x128xf32>
    %161 = vector.shape_cast %160 : vector<1x8x128xf32> to vector<8x128xf32>
    %c8_i32_82 = arith.constant 8 : i32
    %162 = vector.broadcast %c8_i32_82 : i32 to vector<8x128xi32>
    %163 = arith.cmpi eq, %3, %162 : vector<8x128xi32>
    %cst_83 = arith.constant 0.333333343 : f32
    %164 = vector.broadcast %cst_83 : f32 to vector<8x128xf32>
    %165 = arith.mulf %159, %164 : vector<8x128xf32>
    %cst_84 = arith.constant -1.000000e+30 : f32
    %166 = vector.broadcast %cst_84 : f32 to vector<8x128xf32>
    %167 = arith.select %163, %166, %165 : vector<8x128xi1>, vector<8x128xf32>
    %cst_85 = arith.constant 0.333333343 : f32
    %168 = vector.broadcast %cst_85 : f32 to vector<8x128xf32>
    %169 = arith.mulf %161, %168 : vector<8x128xf32>
    %cst_86 = arith.constant -1.000000e+30 : f32
    %170 = vector.broadcast %cst_86 : f32 to vector<8x128xf32>
    %171 = arith.select %163, %170, %169 : vector<8x128xi1>, vector<8x128xf32>
    %172 = arith.maximumf %154, %159 : vector<8x128xf32>
    %173 = arith.maximumf %155, %167 : vector<8x128xf32>
    %174 = arith.maximumf %156, %171 : vector<8x128xf32>
    %175 = arith.select %163, %159, %157 : vector<8x128xi1>, vector<8x128xf32>
    %c9 = arith.constant 9 : index
    %c0_87 = arith.constant 0 : index
    %c0_88 = arith.constant 0 : index
    %176 = vector.load %arg2[%c9, %c0_87, %c0_88] : memref<10x8x128xf32, #tpu.memory_space<vmem>>, vector<1x8x128xf32>
    %177 = vector.shape_cast %176 : vector<1x8x128xf32> to vector<8x128xf32>
    %c9_89 = arith.constant 9 : index
    %c0_90 = arith.constant 0 : index
    %c0_91 = arith.constant 0 : index
    %178 = vector.load %arg3[%c9_89, %c0_90, %c0_91] : memref<10x8x128xf32, #tpu.memory_space<vmem>>, vector<1x8x128xf32>
    %179 = vector.shape_cast %178 : vector<1x8x128xf32> to vector<8x128xf32>
    %c9_i32 = arith.constant 9 : i32
    %180 = vector.broadcast %c9_i32 : i32 to vector<8x128xi32>
    %181 = arith.cmpi eq, %3, %180 : vector<8x128xi32>
    %cst_92 = arith.constant 0.333333343 : f32
    %182 = vector.broadcast %cst_92 : f32 to vector<8x128xf32>
    %183 = arith.mulf %177, %182 : vector<8x128xf32>
    %cst_93 = arith.constant -1.000000e+30 : f32
    %184 = vector.broadcast %cst_93 : f32 to vector<8x128xf32>
    %185 = arith.select %181, %184, %183 : vector<8x128xi1>, vector<8x128xf32>
    %cst_94 = arith.constant 0.333333343 : f32
    %186 = vector.broadcast %cst_94 : f32 to vector<8x128xf32>
    %187 = arith.mulf %179, %186 : vector<8x128xf32>
    %cst_95 = arith.constant -1.000000e+30 : f32
    %188 = vector.broadcast %cst_95 : f32 to vector<8x128xf32>
    %189 = arith.select %181, %188, %187 : vector<8x128xi1>, vector<8x128xf32>
    %190 = arith.maximumf %172, %177 : vector<8x128xf32>
    %191 = arith.maximumf %173, %185 : vector<8x128xf32>
    %192 = arith.maximumf %174, %189 : vector<8x128xf32>
    %193 = arith.select %181, %177, %175 : vector<8x128xi1>, vector<8x128xf32>
    %c0_96 = arith.constant 0 : index
    %c0_97 = arith.constant 0 : index
    %c0_98 = arith.constant 0 : index
    %194 = vector.load %arg2[%c0_96, %c0_97, %c0_98] : memref<10x8x128xf32, #tpu.memory_space<vmem>>, vector<1x8x128xf32>
    %195 = vector.shape_cast %194 : vector<1x8x128xf32> to vector<8x128xf32>
    %c0_99 = arith.constant 0 : index
    %c0_100 = arith.constant 0 : index
    %c0_101 = arith.constant 0 : index
    %196 = vector.load %arg3[%c0_99, %c0_100, %c0_101] : memref<10x8x128xf32, #tpu.memory_space<vmem>>, vector<1x8x128xf32>
    %197 = vector.shape_cast %196 : vector<1x8x128xf32> to vector<8x128xf32>
    %c0_i32_102 = arith.constant 0 : i32
    %198 = vector.broadcast %c0_i32_102 : i32 to vector<8x128xi32>
    %199 = arith.cmpi eq, %3, %198 : vector<8x128xi32>
    %cst_103 = arith.constant 0.333333343 : f32
    %200 = vector.broadcast %cst_103 : f32 to vector<8x128xf32>
    %201 = arith.mulf %195, %200 : vector<8x128xf32>
    %cst_104 = arith.constant -1.000000e+30 : f32
    %202 = vector.broadcast %cst_104 : f32 to vector<8x128xf32>
    %203 = arith.select %199, %202, %201 : vector<8x128xi1>, vector<8x128xf32>
    %cst_105 = arith.constant 0.333333343 : f32
    %204 = vector.broadcast %cst_105 : f32 to vector<8x128xf32>
    %205 = arith.mulf %197, %204 : vector<8x128xf32>
    %cst_106 = arith.constant -1.000000e+30 : f32
    %206 = vector.broadcast %cst_106 : f32 to vector<8x128xf32>
    %207 = arith.select %199, %206, %205 : vector<8x128xi1>, vector<8x128xf32>
    %208 = arith.subf %195, %190 : vector<8x128xf32>
    %209 = math.exp %208 : vector<8x128xf32>
    %210 = arith.subf %203, %191 : vector<8x128xf32>
    %211 = math.exp %210 : vector<8x128xf32>
    %212 = arith.subf %207, %192 : vector<8x128xf32>
    %213 = math.exp %212 : vector<8x128xf32>
    %214 = arith.subf %207, %203 : vector<8x128xf32>
    %215 = arith.mulf %213, %214 : vector<8x128xf32>
    %c1_107 = arith.constant 1 : index
    %c0_108 = arith.constant 0 : index
    %c0_109 = arith.constant 0 : index
    %216 = vector.load %arg2[%c1_107, %c0_108, %c0_109] : memref<10x8x128xf32, #tpu.memory_space<vmem>>, vector<1x8x128xf32>
    %217 = vector.shape_cast %216 : vector<1x8x128xf32> to vector<8x128xf32>
    %c1_110 = arith.constant 1 : index
    %c0_111 = arith.constant 0 : index
    %c0_112 = arith.constant 0 : index
    %218 = vector.load %arg3[%c1_110, %c0_111, %c0_112] : memref<10x8x128xf32, #tpu.memory_space<vmem>>, vector<1x8x128xf32>
    %219 = vector.shape_cast %218 : vector<1x8x128xf32> to vector<8x128xf32>
    %c1_i32_113 = arith.constant 1 : i32
    %220 = vector.broadcast %c1_i32_113 : i32 to vector<8x128xi32>
    %221 = arith.cmpi eq, %3, %220 : vector<8x128xi32>
    %cst_114 = arith.constant 0.333333343 : f32
    %222 = vector.broadcast %cst_114 : f32 to vector<8x128xf32>
    %223 = arith.mulf %217, %222 : vector<8x128xf32>
    %cst_115 = arith.constant -1.000000e+30 : f32
    %224 = vector.broadcast %cst_115 : f32 to vector<8x128xf32>
    %225 = arith.select %221, %224, %223 : vector<8x128xi1>, vector<8x128xf32>
    %cst_116 = arith.constant 0.333333343 : f32
    %226 = vector.broadcast %cst_116 : f32 to vector<8x128xf32>
    %227 = arith.mulf %219, %226 : vector<8x128xf32>
    %cst_117 = arith.constant -1.000000e+30 : f32
    %228 = vector.broadcast %cst_117 : f32 to vector<8x128xf32>
    %229 = arith.select %221, %228, %227 : vector<8x128xi1>, vector<8x128xf32>
    %230 = arith.subf %217, %190 : vector<8x128xf32>
    %231 = math.exp %230 : vector<8x128xf32>
    %232 = arith.subf %225, %191 : vector<8x128xf32>
    %233 = math.exp %232 : vector<8x128xf32>
    %234 = arith.subf %229, %192 : vector<8x128xf32>
    %235 = math.exp %234 : vector<8x128xf32>
    %236 = arith.subf %229, %225 : vector<8x128xf32>
    %237 = arith.mulf %235, %236 : vector<8x128xf32>
    %238 = arith.addf %209, %231 : vector<8x128xf32>
    %239 = arith.addf %211, %233 : vector<8x128xf32>
    %240 = arith.addf %213, %235 : vector<8x128xf32>
    %241 = arith.addf %215, %237 : vector<8x128xf32>
    %c2_118 = arith.constant 2 : index
    %c0_119 = arith.constant 0 : index
    %c0_120 = arith.constant 0 : index
    %242 = vector.load %arg2[%c2_118, %c0_119, %c0_120] : memref<10x8x128xf32, #tpu.memory_space<vmem>>, vector<1x8x128xf32>
    %243 = vector.shape_cast %242 : vector<1x8x128xf32> to vector<8x128xf32>
    %c2_121 = arith.constant 2 : index
    %c0_122 = arith.constant 0 : index
    %c0_123 = arith.constant 0 : index
    %244 = vector.load %arg3[%c2_121, %c0_122, %c0_123] : memref<10x8x128xf32, #tpu.memory_space<vmem>>, vector<1x8x128xf32>
    %245 = vector.shape_cast %244 : vector<1x8x128xf32> to vector<8x128xf32>
    %c2_i32_124 = arith.constant 2 : i32
    %246 = vector.broadcast %c2_i32_124 : i32 to vector<8x128xi32>
    %247 = arith.cmpi eq, %3, %246 : vector<8x128xi32>
    %cst_125 = arith.constant 0.333333343 : f32
    %248 = vector.broadcast %cst_125 : f32 to vector<8x128xf32>
    %249 = arith.mulf %243, %248 : vector<8x128xf32>
    %cst_126 = arith.constant -1.000000e+30 : f32
    %250 = vector.broadcast %cst_126 : f32 to vector<8x128xf32>
    %251 = arith.select %247, %250, %249 : vector<8x128xi1>, vector<8x128xf32>
    %cst_127 = arith.constant 0.333333343 : f32
    %252 = vector.broadcast %cst_127 : f32 to vector<8x128xf32>
    %253 = arith.mulf %245, %252 : vector<8x128xf32>
    %cst_128 = arith.constant -1.000000e+30 : f32
    %254 = vector.broadcast %cst_128 : f32 to vector<8x128xf32>
    %255 = arith.select %247, %254, %253 : vector<8x128xi1>, vector<8x128xf32>
    %256 = arith.subf %243, %190 : vector<8x128xf32>
    %257 = math.exp %256 : vector<8x128xf32>
    %258 = arith.subf %251, %191 : vector<8x128xf32>
    %259 = math.exp %258 : vector<8x128xf32>
    %260 = arith.subf %255, %192 : vector<8x128xf32>
    %261 = math.exp %260 : vector<8x128xf32>
    %262 = arith.subf %255, %251 : vector<8x128xf32>
    %263 = arith.mulf %261, %262 : vector<8x128xf32>
    %264 = arith.addf %238, %257 : vector<8x128xf32>
    %265 = arith.addf %239, %259 : vector<8x128xf32>
    %266 = arith.addf %240, %261 : vector<8x128xf32>
    %267 = arith.addf %241, %263 : vector<8x128xf32>
    %c3_129 = arith.constant 3 : index
    %c0_130 = arith.constant 0 : index
    %c0_131 = arith.constant 0 : index
    %268 = vector.load %arg2[%c3_129, %c0_130, %c0_131] : memref<10x8x128xf32, #tpu.memory_space<vmem>>, vector<1x8x128xf32>
    %269 = vector.shape_cast %268 : vector<1x8x128xf32> to vector<8x128xf32>
    %c3_132 = arith.constant 3 : index
    %c0_133 = arith.constant 0 : index
    %c0_134 = arith.constant 0 : index
    %270 = vector.load %arg3[%c3_132, %c0_133, %c0_134] : memref<10x8x128xf32, #tpu.memory_space<vmem>>, vector<1x8x128xf32>
    %271 = vector.shape_cast %270 : vector<1x8x128xf32> to vector<8x128xf32>
    %c3_i32_135 = arith.constant 3 : i32
    %272 = vector.broadcast %c3_i32_135 : i32 to vector<8x128xi32>
    %273 = arith.cmpi eq, %3, %272 : vector<8x128xi32>
    %cst_136 = arith.constant 0.333333343 : f32
    %274 = vector.broadcast %cst_136 : f32 to vector<8x128xf32>
    %275 = arith.mulf %269, %274 : vector<8x128xf32>
    %cst_137 = arith.constant -1.000000e+30 : f32
    %276 = vector.broadcast %cst_137 : f32 to vector<8x128xf32>
    %277 = arith.select %273, %276, %275 : vector<8x128xi1>, vector<8x128xf32>
    %cst_138 = arith.constant 0.333333343 : f32
    %278 = vector.broadcast %cst_138 : f32 to vector<8x128xf32>
    %279 = arith.mulf %271, %278 : vector<8x128xf32>
    %cst_139 = arith.constant -1.000000e+30 : f32
    %280 = vector.broadcast %cst_139 : f32 to vector<8x128xf32>
    %281 = arith.select %273, %280, %279 : vector<8x128xi1>, vector<8x128xf32>
    %282 = arith.subf %269, %190 : vector<8x128xf32>
    %283 = math.exp %282 : vector<8x128xf32>
    %284 = arith.subf %277, %191 : vector<8x128xf32>
    %285 = math.exp %284 : vector<8x128xf32>
    %286 = arith.subf %281, %192 : vector<8x128xf32>
    %287 = math.exp %286 : vector<8x128xf32>
    %288 = arith.subf %281, %277 : vector<8x128xf32>
    %289 = arith.mulf %287, %288 : vector<8x128xf32>
    %290 = arith.addf %264, %283 : vector<8x128xf32>
    %291 = arith.addf %265, %285 : vector<8x128xf32>
    %292 = arith.addf %266, %287 : vector<8x128xf32>
    %293 = arith.addf %267, %289 : vector<8x128xf32>
    %c4_140 = arith.constant 4 : index
    %c0_141 = arith.constant 0 : index
    %c0_142 = arith.constant 0 : index
    %294 = vector.load %arg2[%c4_140, %c0_141, %c0_142] : memref<10x8x128xf32, #tpu.memory_space<vmem>>, vector<1x8x128xf32>
    %295 = vector.shape_cast %294 : vector<1x8x128xf32> to vector<8x128xf32>
    %c4_143 = arith.constant 4 : index
    %c0_144 = arith.constant 0 : index
    %c0_145 = arith.constant 0 : index
    %296 = vector.load %arg3[%c4_143, %c0_144, %c0_145] : memref<10x8x128xf32, #tpu.memory_space<vmem>>, vector<1x8x128xf32>
    %297 = vector.shape_cast %296 : vector<1x8x128xf32> to vector<8x128xf32>
    %c4_i32_146 = arith.constant 4 : i32
    %298 = vector.broadcast %c4_i32_146 : i32 to vector<8x128xi32>
    %299 = arith.cmpi eq, %3, %298 : vector<8x128xi32>
    %cst_147 = arith.constant 0.333333343 : f32
    %300 = vector.broadcast %cst_147 : f32 to vector<8x128xf32>
    %301 = arith.mulf %295, %300 : vector<8x128xf32>
    %cst_148 = arith.constant -1.000000e+30 : f32
    %302 = vector.broadcast %cst_148 : f32 to vector<8x128xf32>
    %303 = arith.select %299, %302, %301 : vector<8x128xi1>, vector<8x128xf32>
    %cst_149 = arith.constant 0.333333343 : f32
    %304 = vector.broadcast %cst_149 : f32 to vector<8x128xf32>
    %305 = arith.mulf %297, %304 : vector<8x128xf32>
    %cst_150 = arith.constant -1.000000e+30 : f32
    %306 = vector.broadcast %cst_150 : f32 to vector<8x128xf32>
    %307 = arith.select %299, %306, %305 : vector<8x128xi1>, vector<8x128xf32>
    %308 = arith.subf %295, %190 : vector<8x128xf32>
    %309 = math.exp %308 : vector<8x128xf32>
    %310 = arith.subf %303, %191 : vector<8x128xf32>
    %311 = math.exp %310 : vector<8x128xf32>
    %312 = arith.subf %307, %192 : vector<8x128xf32>
    %313 = math.exp %312 : vector<8x128xf32>
    %314 = arith.subf %307, %303 : vector<8x128xf32>
    %315 = arith.mulf %313, %314 : vector<8x128xf32>
    %316 = arith.addf %290, %309 : vector<8x128xf32>
    %317 = arith.addf %291, %311 : vector<8x128xf32>
    %318 = arith.addf %292, %313 : vector<8x128xf32>
    %319 = arith.addf %293, %315 : vector<8x128xf32>
    %c5_151 = arith.constant 5 : index
    %c0_152 = arith.constant 0 : index
    %c0_153 = arith.constant 0 : index
    %320 = vector.load %arg2[%c5_151, %c0_152, %c0_153] : memref<10x8x128xf32, #tpu.memory_space<vmem>>, vector<1x8x128xf32>
    %321 = vector.shape_cast %320 : vector<1x8x128xf32> to vector<8x128xf32>
    %c5_154 = arith.constant 5 : index
    %c0_155 = arith.constant 0 : index
    %c0_156 = arith.constant 0 : index
    %322 = vector.load %arg3[%c5_154, %c0_155, %c0_156] : memref<10x8x128xf32, #tpu.memory_space<vmem>>, vector<1x8x128xf32>
    %323 = vector.shape_cast %322 : vector<1x8x128xf32> to vector<8x128xf32>
    %c5_i32_157 = arith.constant 5 : i32
    %324 = vector.broadcast %c5_i32_157 : i32 to vector<8x128xi32>
    %325 = arith.cmpi eq, %3, %324 : vector<8x128xi32>
    %cst_158 = arith.constant 0.333333343 : f32
    %326 = vector.broadcast %cst_158 : f32 to vector<8x128xf32>
    %327 = arith.mulf %321, %326 : vector<8x128xf32>
    %cst_159 = arith.constant -1.000000e+30 : f32
    %328 = vector.broadcast %cst_159 : f32 to vector<8x128xf32>
    %329 = arith.select %325, %328, %327 : vector<8x128xi1>, vector<8x128xf32>
    %cst_160 = arith.constant 0.333333343 : f32
    %330 = vector.broadcast %cst_160 : f32 to vector<8x128xf32>
    %331 = arith.mulf %323, %330 : vector<8x128xf32>
    %cst_161 = arith.constant -1.000000e+30 : f32
    %332 = vector.broadcast %cst_161 : f32 to vector<8x128xf32>
    %333 = arith.select %325, %332, %331 : vector<8x128xi1>, vector<8x128xf32>
    %334 = arith.subf %321, %190 : vector<8x128xf32>
    %335 = math.exp %334 : vector<8x128xf32>
    %336 = arith.subf %329, %191 : vector<8x128xf32>
    %337 = math.exp %336 : vector<8x128xf32>
    %338 = arith.subf %333, %192 : vector<8x128xf32>
    %339 = math.exp %338 : vector<8x128xf32>
    %340 = arith.subf %333, %329 : vector<8x128xf32>
    %341 = arith.mulf %339, %340 : vector<8x128xf32>
    %342 = arith.addf %316, %335 : vector<8x128xf32>
    %343 = arith.addf %317, %337 : vector<8x128xf32>
    %344 = arith.addf %318, %339 : vector<8x128xf32>
    %345 = arith.addf %319, %341 : vector<8x128xf32>
    %c6_162 = arith.constant 6 : index
    %c0_163 = arith.constant 0 : index
    %c0_164 = arith.constant 0 : index
    %346 = vector.load %arg2[%c6_162, %c0_163, %c0_164] : memref<10x8x128xf32, #tpu.memory_space<vmem>>, vector<1x8x128xf32>
    %347 = vector.shape_cast %346 : vector<1x8x128xf32> to vector<8x128xf32>
    %c6_165 = arith.constant 6 : index
    %c0_166 = arith.constant 0 : index
    %c0_167 = arith.constant 0 : index
    %348 = vector.load %arg3[%c6_165, %c0_166, %c0_167] : memref<10x8x128xf32, #tpu.memory_space<vmem>>, vector<1x8x128xf32>
    %349 = vector.shape_cast %348 : vector<1x8x128xf32> to vector<8x128xf32>
    %c6_i32_168 = arith.constant 6 : i32
    %350 = vector.broadcast %c6_i32_168 : i32 to vector<8x128xi32>
    %351 = arith.cmpi eq, %3, %350 : vector<8x128xi32>
    %cst_169 = arith.constant 0.333333343 : f32
    %352 = vector.broadcast %cst_169 : f32 to vector<8x128xf32>
    %353 = arith.mulf %347, %352 : vector<8x128xf32>
    %cst_170 = arith.constant -1.000000e+30 : f32
    %354 = vector.broadcast %cst_170 : f32 to vector<8x128xf32>
    %355 = arith.select %351, %354, %353 : vector<8x128xi1>, vector<8x128xf32>
    %cst_171 = arith.constant 0.333333343 : f32
    %356 = vector.broadcast %cst_171 : f32 to vector<8x128xf32>
    %357 = arith.mulf %349, %356 : vector<8x128xf32>
    %cst_172 = arith.constant -1.000000e+30 : f32
    %358 = vector.broadcast %cst_172 : f32 to vector<8x128xf32>
    %359 = arith.select %351, %358, %357 : vector<8x128xi1>, vector<8x128xf32>
    %360 = arith.subf %347, %190 : vector<8x128xf32>
    %361 = math.exp %360 : vector<8x128xf32>
    %362 = arith.subf %355, %191 : vector<8x128xf32>
    %363 = math.exp %362 : vector<8x128xf32>
    %364 = arith.subf %359, %192 : vector<8x128xf32>
    %365 = math.exp %364 : vector<8x128xf32>
    %366 = arith.subf %359, %355 : vector<8x128xf32>
    %367 = arith.mulf %365, %366 : vector<8x128xf32>
    %368 = arith.addf %342, %361 : vector<8x128xf32>
    %369 = arith.addf %343, %363 : vector<8x128xf32>
    %370 = arith.addf %344, %365 : vector<8x128xf32>
    %371 = arith.addf %345, %367 : vector<8x128xf32>
    %c7_173 = arith.constant 7 : index
    %c0_174 = arith.constant 0 : index
    %c0_175 = arith.constant 0 : index
    %372 = vector.load %arg2[%c7_173, %c0_174, %c0_175] : memref<10x8x128xf32, #tpu.memory_space<vmem>>, vector<1x8x128xf32>
    %373 = vector.shape_cast %372 : vector<1x8x128xf32> to vector<8x128xf32>
    %c7_176 = arith.constant 7 : index
    %c0_177 = arith.constant 0 : index
    %c0_178 = arith.constant 0 : index
    %374 = vector.load %arg3[%c7_176, %c0_177, %c0_178] : memref<10x8x128xf32, #tpu.memory_space<vmem>>, vector<1x8x128xf32>
    %375 = vector.shape_cast %374 : vector<1x8x128xf32> to vector<8x128xf32>
    %c7_i32_179 = arith.constant 7 : i32
    %376 = vector.broadcast %c7_i32_179 : i32 to vector<8x128xi32>
    %377 = arith.cmpi eq, %3, %376 : vector<8x128xi32>
    %cst_180 = arith.constant 0.333333343 : f32
    %378 = vector.broadcast %cst_180 : f32 to vector<8x128xf32>
    %379 = arith.mulf %373, %378 : vector<8x128xf32>
    %cst_181 = arith.constant -1.000000e+30 : f32
    %380 = vector.broadcast %cst_181 : f32 to vector<8x128xf32>
    %381 = arith.select %377, %380, %379 : vector<8x128xi1>, vector<8x128xf32>
    %cst_182 = arith.constant 0.333333343 : f32
    %382 = vector.broadcast %cst_182 : f32 to vector<8x128xf32>
    %383 = arith.mulf %375, %382 : vector<8x128xf32>
    %cst_183 = arith.constant -1.000000e+30 : f32
    %384 = vector.broadcast %cst_183 : f32 to vector<8x128xf32>
    %385 = arith.select %377, %384, %383 : vector<8x128xi1>, vector<8x128xf32>
    %386 = arith.subf %373, %190 : vector<8x128xf32>
    %387 = math.exp %386 : vector<8x128xf32>
    %388 = arith.subf %381, %191 : vector<8x128xf32>
    %389 = math.exp %388 : vector<8x128xf32>
    %390 = arith.subf %385, %192 : vector<8x128xf32>
    %391 = math.exp %390 : vector<8x128xf32>
    %392 = arith.subf %385, %381 : vector<8x128xf32>
    %393 = arith.mulf %391, %392 : vector<8x128xf32>
    %394 = arith.addf %368, %387 : vector<8x128xf32>
    %395 = arith.addf %369, %389 : vector<8x128xf32>
    %396 = arith.addf %370, %391 : vector<8x128xf32>
    %397 = arith.addf %371, %393 : vector<8x128xf32>
    %c8_184 = arith.constant 8 : index
    %c0_185 = arith.constant 0 : index
    %c0_186 = arith.constant 0 : index
    %398 = vector.load %arg2[%c8_184, %c0_185, %c0_186] : memref<10x8x128xf32, #tpu.memory_space<vmem>>, vector<1x8x128xf32>
    %399 = vector.shape_cast %398 : vector<1x8x128xf32> to vector<8x128xf32>
    %c8_187 = arith.constant 8 : index
    %c0_188 = arith.constant 0 : index
    %c0_189 = arith.constant 0 : index
    %400 = vector.load %arg3[%c8_187, %c0_188, %c0_189] : memref<10x8x128xf32, #tpu.memory_space<vmem>>, vector<1x8x128xf32>
    %401 = vector.shape_cast %400 : vector<1x8x128xf32> to vector<8x128xf32>
    %c8_i32_190 = arith.constant 8 : i32
    %402 = vector.broadcast %c8_i32_190 : i32 to vector<8x128xi32>
    %403 = arith.cmpi eq, %3, %402 : vector<8x128xi32>
    %cst_191 = arith.constant 0.333333343 : f32
    %404 = vector.broadcast %cst_191 : f32 to vector<8x128xf32>
    %405 = arith.mulf %399, %404 : vector<8x128xf32>
    %cst_192 = arith.constant -1.000000e+30 : f32
    %406 = vector.broadcast %cst_192 : f32 to vector<8x128xf32>
    %407 = arith.select %403, %406, %405 : vector<8x128xi1>, vector<8x128xf32>
    %cst_193 = arith.constant 0.333333343 : f32
    %408 = vector.broadcast %cst_193 : f32 to vector<8x128xf32>
    %409 = arith.mulf %401, %408 : vector<8x128xf32>
    %cst_194 = arith.constant -1.000000e+30 : f32
    %410 = vector.broadcast %cst_194 : f32 to vector<8x128xf32>
    %411 = arith.select %403, %410, %409 : vector<8x128xi1>, vector<8x128xf32>
    %412 = arith.subf %399, %190 : vector<8x128xf32>
    %413 = math.exp %412 : vector<8x128xf32>
    %414 = arith.subf %407, %191 : vector<8x128xf32>
    %415 = math.exp %414 : vector<8x128xf32>
    %416 = arith.subf %411, %192 : vector<8x128xf32>
    %417 = math.exp %416 : vector<8x128xf32>
    %418 = arith.subf %411, %407 : vector<8x128xf32>
    %419 = arith.mulf %417, %418 : vector<8x128xf32>
    %420 = arith.addf %394, %413 : vector<8x128xf32>
    %421 = arith.addf %395, %415 : vector<8x128xf32>
    %422 = arith.addf %396, %417 : vector<8x128xf32>
    %423 = arith.addf %397, %419 : vector<8x128xf32>
    %c9_195 = arith.constant 9 : index
    %c0_196 = arith.constant 0 : index
    %c0_197 = arith.constant 0 : index
    %424 = vector.load %arg2[%c9_195, %c0_196, %c0_197] : memref<10x8x128xf32, #tpu.memory_space<vmem>>, vector<1x8x128xf32>
    %425 = vector.shape_cast %424 : vector<1x8x128xf32> to vector<8x128xf32>
    %c9_198 = arith.constant 9 : index
    %c0_199 = arith.constant 0 : index
    %c0_200 = arith.constant 0 : index
    %426 = vector.load %arg3[%c9_198, %c0_199, %c0_200] : memref<10x8x128xf32, #tpu.memory_space<vmem>>, vector<1x8x128xf32>
    %427 = vector.shape_cast %426 : vector<1x8x128xf32> to vector<8x128xf32>
    %c9_i32_201 = arith.constant 9 : i32
    %428 = vector.broadcast %c9_i32_201 : i32 to vector<8x128xi32>
    %429 = arith.cmpi eq, %3, %428 : vector<8x128xi32>
    %cst_202 = arith.constant 0.333333343 : f32
    %430 = vector.broadcast %cst_202 : f32 to vector<8x128xf32>
    %431 = arith.mulf %425, %430 : vector<8x128xf32>
    %cst_203 = arith.constant -1.000000e+30 : f32
    %432 = vector.broadcast %cst_203 : f32 to vector<8x128xf32>
    %433 = arith.select %429, %432, %431 : vector<8x128xi1>, vector<8x128xf32>
    %cst_204 = arith.constant 0.333333343 : f32
    %434 = vector.broadcast %cst_204 : f32 to vector<8x128xf32>
    %435 = arith.mulf %427, %434 : vector<8x128xf32>
    %cst_205 = arith.constant -1.000000e+30 : f32
    %436 = vector.broadcast %cst_205 : f32 to vector<8x128xf32>
    %437 = arith.select %429, %436, %435 : vector<8x128xi1>, vector<8x128xf32>
    %438 = arith.subf %425, %190 : vector<8x128xf32>
    %439 = math.exp %438 : vector<8x128xf32>
    %440 = arith.subf %433, %191 : vector<8x128xf32>
    %441 = math.exp %440 : vector<8x128xf32>
    %442 = arith.subf %437, %192 : vector<8x128xf32>
    %443 = math.exp %442 : vector<8x128xf32>
    %444 = arith.subf %437, %433 : vector<8x128xf32>
    %445 = arith.mulf %443, %444 : vector<8x128xf32>
    %446 = arith.addf %420, %439 : vector<8x128xf32>
    %447 = arith.addf %421, %441 : vector<8x128xf32>
    %448 = arith.addf %422, %443 : vector<8x128xf32>
    %449 = arith.addf %423, %445 : vector<8x128xf32>
    %450 = math.log %446 : vector<8x128xf32>
    %451 = arith.addf %450, %190 : vector<8x128xf32>
    %452 = arith.subf %451, %193 : vector<8x128xf32>
    %453 = math.log %447 : vector<8x128xf32>
    %454 = arith.addf %453, %191 : vector<8x128xf32>
    %455 = math.log %448 : vector<8x128xf32>
    %456 = arith.addf %455, %192 : vector<8x128xf32>
    %457 = tpu.reciprocal %448 : vector<8x128xf32> -> vector<8x128xf32>
    %458 = arith.mulf %449, %457 : vector<8x128xf32>
    %459 = arith.subf %454, %456 : vector<8x128xf32>
    %460 = arith.addf %458, %459 : vector<8x128xf32>
    %cst_206 = arith.constant 1.000000e+00 : f32
    %461 = vector.broadcast %cst_206 : f32 to vector<8x128xf32>
    %462 = arith.mulf %461, %460 : vector<8x128xf32>
    %463 = arith.addf %452, %462 : vector<8x128xf32>
    %cst_207 = arith.constant 0.000000e+00 : f32
    %464 = vector.broadcast %cst_207 : f32 to vector<8x128xf32>
    %465 = arith.select %15, %463, %464 : vector<8x128xi1>, vector<8x128xf32>
    %c0_208 = arith.constant 0 : index
    %c0_209 = arith.constant 0 : index
    %466 = vector.load %arg5[%c0_208, %c0_209] : memref<8x128xf32, #tpu.memory_space<vmem>>, vector<8x128xf32>
    %467 = arith.addf %466, %465 : vector<8x128xf32>
    %c0_210 = arith.constant 0 : index
    %c0_211 = arith.constant 0 : index
    %468 = vector.load %arg5[%c0_210, %c0_211] : memref<8x128xf32, #tpu.memory_space<vmem>>, vector<8x128xf32>
    tpu.vector_store %arg5[%c0_210, %c0_211], %467 {strides = array<i32>} : memref<8x128xf32, #tpu.memory_space<vmem>>, vector<8x128xf32>,
    return
  }
  func.func @transform_0(%arg0: i32, %arg1: i32) -> (i32, i32, i32) {
    %c1_i32 = arith.constant 1 : i32
    %0 = arith.muli %arg0, %c1_i32 : i32
    %1 = arith.addi %0, %arg1 : i32
    %c0_i32 = arith.constant 0 : i32
    %2 = arith.minsi %1, %c0_i32 : i32
    %c0_i32_0 = arith.constant 0 : i32
    %c0_i32_1 = arith.constant 0 : i32
    %c0_i32_2 = arith.constant 0 : i32
    return %c0_i32_0, %2, %c0_i32_1 : i32, i32, i32
  }
  func.func @transform_1(%arg0: i32, %arg1: i32) -> (i32, i32, i32) {
    %c1_i32 = arith.constant 1 : i32
    %0 = arith.muli %arg0, %c1_i32 : i32
    %1 = arith.addi %0, %arg1 : i32
    %c0_i32 = arith.constant 0 : i32
    %2 = arith.minsi %1, %c0_i32 : i32
    %c0_i32_0 = arith.constant 0 : i32
    %c0_i32_1 = arith.constant 0 : i32
    %c0_i32_2 = arith.constant 0 : i32
    return %c0_i32_0, %2, %c0_i32_1 : i32, i32, i32
  }
  func.func @transform_2(%arg0: i32, %arg1: i32) -> (i32, i32) {
    %c1_i32 = arith.constant 1 : i32
    %0 = arith.muli %arg0, %c1_i32 : i32
    %1 = arith.addi %0, %arg1 : i32
    %c0_i32 = arith.constant 0 : i32
    %2 = arith.minsi %1, %c0_i32 : i32
    %c0_i32_0 = arith.constant 0 : i32
    %c0_i32_1 = arith.constant 0 : i32
    return %2, %c0_i32_0 : i32, i32
  }
  func.func @transform_3(%arg0: i32, %arg1: i32) -> (i32, i32) {
    %c0_i32 = arith.constant 0 : i32
    %c0_i32_0 = arith.constant 0 : i32
    return %arg0, %c0_i32 : i32, i32
  }
}

</mosaic_0001>

<llo_original>
// kernel: tpu_custom_call.1
$region0: #{tpu_custom_call.1}
  #allocation0 [shape = 'u32[]', space=smem, size = 0x4, offset = 0x4, fixed_abs, tag = 'smem constant byte address 0x4 - core index']
  #allocation1 [shape = 'u32[144,128]{1,0:T(1,128)}', space=vmem, size = 0x12000, scoped, tag = 'internal scratch']
  %s0 = inlined_call_operand.hbm [shape: f32[10,8,128], index: 0, kind: input, shape index: {}]
  %s1 = inlined_call_operand.hbm [shape: f32[10,8,128], index: 1, kind: input, shape index: {}]
  %s2 = inlined_call_operand.hbm [shape: s32[8,128], index: 2, kind: input, shape index: {}]
  %s3 = inlined_call_operand.hbm [shape: f32[8,128], index: 3, kind: output, shape index: {}]
  %s4 = sld [smem:[#allocation0]]
  $region38: #{tpu_custom_call.1} parent=0
    _
  %s6 = ssub.s32 1, %s4
  %s7 = scalar_select 0, %s6, %s4
  $region1: #{tpu_custom_call.1} parent=0
    #allocation2 [shape = 'u8[40960]{0}', space=vmem, size = 0xa000, scoped, tag = 'input window, operand 0, single buffered']
    #allocation3 [shape = 's32[1]{0}', space=sflag, size = 0x4, scoped, tag = 'scoped memory for tpu_custom_call.1']
    #allocation4 [shape = 's32[1]{0}', space=sflag, size = 0x4, scoped, tag = 'scoped memory for tpu_custom_call.1']
    #allocation5 [shape = 'u8[40960]{0}', space=vmem, size = 0xa000, scoped, tag = 'input window, operand 1, single buffered']
    #allocation6 [shape = 's32[1]{0}', space=sflag, size = 0x4, scoped, tag = 'scoped memory for tpu_custom_call.1']
    #allocation7 [shape = 'u8[4096]{0}', space=vmem, size = 0x1000, scoped, tag = 'input window, operand 2, single buffered']
    #allocation8 [shape = 'u8[4096]{0}', space=vmem, size = 0x1000, scoped, tag = 'output window, operand 0, single buffered']
    %8 = vsyncpa [#allocation3], 0
    %9 = vsyncpa [#allocation6], 0
    %10 = vsyncpa [#allocation4], 0
    // Predicated region
    $region2: #{tpu_custom_call.1} parent=1 // pred_check
      _
    $region3: #{tpu_custom_call.1} parent=1 // pred_check_branch
      %12 = sbr.rel (0) target = $region5
    $region4: #{tpu_custom_call.1} parent=1 // pred_region
      %s13 = sadd.s32 0, 0
      %p14 = scmp.lt.s32.totalorder %s13, 0
      %s15 = scalar_select %p14, %s13, 0
      %s17 = ssub.s32 1280, 1280
      %18 = vsyncadd [#allocation3], %s17
      %s19 = smul.addr %s15, 128
      %s20 = scalar_lea.hbm %s0, %s19
      %s21 = sshll.u32 [#allocation2], 4
      %s22 = int_to_ptr.vmem [resolvable:$true] %s21
      %27 = dma.hbm_to_vmem [thread:$0]  %s20, 1280, %s22, [#allocation3], 128, 128, 8
    $region5: #{tpu_custom_call.1} parent=1 // pred_fallthru
      _
    // Predicated region
    $region6: #{tpu_custom_call.1} parent=1 // pred_check
      _
    $region7: #{tpu_custom_call.1} parent=1 // pred_check_branch
      %29 = sbr.rel (0) target = $region9
    $region8: #{tpu_custom_call.1} parent=1 // pred_region
      %s30 = sadd.s32 0, 0
      %p31 = scmp.lt.s32.totalorder %s30, 0
      %s32 = scalar_select %p31, %s30, 0
      %s34 = ssub.s32 1280, 1280
      %35 = vsyncadd [#allocation6], %s34
      %s36 = smul.addr %s32, 128
      %s37 = scalar_lea.hbm %s1, %s36
      %s38 = sshll.u32 [#allocation5], 4
      %s39 = int_to_ptr.vmem [resolvable:$true] %s38
      %44 = dma.hbm_to_vmem [thread:$0]  %s37, 1280, %s39, [#allocation6], 128, 128, 8
    $region9: #{tpu_custom_call.1} parent=1 // pred_fallthru
      _
    // Predicated region
    $region10: #{tpu_custom_call.1} parent=1 // pred_check
      _
    $region11: #{tpu_custom_call.1} parent=1 // pred_check_branch
      %46 = sbr.rel (0) target = $region13
    $region12: #{tpu_custom_call.1} parent=1 // pred_region
      %s47 = sadd.s32 0, 0
      %p48 = scmp.lt.s32.totalorder %s47, 0
      %s49 = scalar_select %p48, %s47, 0
      %s51 = ssub.s32 128, 128
      %52 = vsyncadd [#allocation6], %s51
      %s53 = smul.addr %s49, 128
      %s54 = scalar_lea.hbm %s2, %s53
      %s56 = sshll.u32 [#allocation7], 4
      %s57 = int_to_ptr.vmem [resolvable:$true] %s56
      %59 = dma.hbm_to_vmem [thread:$0]  %s54, 128, %s57, [#allocation6]
    $region13: #{tpu_custom_call.1} parent=1 // pred_fallthru
      _
    // Predicated region
    $region14: #{tpu_custom_call.1} parent=1 // pred_check
      _
    $region15: #{tpu_custom_call.1} parent=1 // pred_check_branch
      %61 = sbr.rel (0) target = $region17
    $region16: #{tpu_custom_call.1} parent=1 // pred_region
      %62 = dma.done [#allocation3], 1280
    $region17: #{tpu_custom_call.1} parent=1 // pred_fallthru
      _
    // Predicated region
    $region18: #{tpu_custom_call.1} parent=1 // pred_check
      _
    $region19: #{tpu_custom_call.1} parent=1 // pred_check_branch
      %64 = sbr.rel (0) target = $region21
    $region20: #{tpu_custom_call.1} parent=1 // pred_region
      %65 = dma.done [#allocation6], 1280
    $region21: #{tpu_custom_call.1} parent=1 // pred_fallthru
      _
    // Predicated region
    $region22: #{tpu_custom_call.1} parent=1 // pred_check
      _
    $region23: #{tpu_custom_call.1} parent=1 // pred_check_branch
      %67 = sbr.rel (0) target = $region25
    $region24: #{tpu_custom_call.1} parent=1 // pred_region
      %68 = dma.done [#allocation6], 128
    $region25: #{tpu_custom_call.1} parent=1 // pred_fallthru
      _
    %s69 = sadd.s32 0, 0
    %p70 = scmp.lt.s32.totalorder %s69, 0
    %s71 = scalar_select %p70, %s69, 0
    %s72 = sadd.s32 0, 0
    %p73 = scmp.lt.s32.totalorder %s72, 0
    %s74 = scalar_select %p73, %s72, 0
    %s75 = sadd.s32 0, 0
    %p76 = scmp.lt.s32.totalorder %s75, 0
    %s77 = scalar_select %p76, %s75, 0
    %p78 = scmp.eq.s32.totalorder 0, 0
    // Predicated region
    $region26: #{tpu_custom_call.1} parent=1 // pred_check
      %p79 = pneg %p78
    $region27: #{tpu_custom_call.1} parent=1 // pred_check_branch
      %81 = sbr.rel (%p79) target = $region29
    $region28: #{tpu_custom_call.1} parent=1 // pred_region
      %82 = vst [vmem:[#allocation8] sm:$0xff] 0.0
    $region29: #{tpu_custom_call.1} parent=1 // pred_fallthru
      _
    %v83 = vld [vmem:[#allocation7] sm:$0xff]
    %s84 = sadd.s32 0, 0
    %s85 = smul.u32 %s84, 1024
    %v86 = vlaneseq
    %v87 = vshrl.u32 %v86, 7
    %v88 = vmul.u32 %v87, 128
    %v89 = vstv %s85
    %v90 = vadd.s32 %v89, %v88
    %v91 = vlaneseq
    %v92 = vand.u32 %v91, 127
    %v93 = vadd.s32 %v90, %v92
    %vm94 = vcmp.lt.s32.totalorder %v93, 8
    %v95 = vld [vmem:[#allocation2] sm:$0xff]
    %v96 = vld [vmem:[#allocation5] sm:$0xff]
    %vm97 = vcmp.eq.s32.totalorder %v83, 0
    %v98 = vmul.f32 %v95, 0.33333334
    %v99 = vsel %vm97, -1e+30, %v98
    %v100 = vmul.f32 %v96, 0.33333334
    %v101 = vsel %vm97, -1e+30, %v100
    %v102 = vsel %vm97, %v95, 0.0
    %s103 = scalar_lea.vmem [#allocation2], 8
    %v104 = vld [vmem:[%s103] sm:$0xff]
    %s105 = scalar_lea.vmem [#allocation5], 8
    %v106 = vld [vmem:[%s105] sm:$0xff]
    %vm107 = vcmp.eq.s32.totalorder %v83, 1
    %v108 = vmul.f32 %v104, 0.33333334
    %v109 = vsel %vm107, -1e+30, %v108
    %v110 = vmul.f32 %v106, 0.33333334
    %v111 = vsel %vm107, -1e+30, %v110
    %v112 = vmax.f32 %v95, %v104
    %v113 = vmax.f32 %v99, %v109
    %v114 = vmax.f32 %v101, %v111
    %v115 = vsel %vm107, %v104, %v102
    %s116 = scalar_lea.vmem [#allocation2], 16
    %v117 = vld [vmem:[%s116] sm:$0xff]
    %s118 = scalar_lea.vmem [#allocation5], 16
    %v119 = vld [vmem:[%s118] sm:$0xff]
    %vm120 = vcmp.eq.s32.totalorder %v83, 2
    %v121 = vmul.f32 %v117, 0.33333334
    %v122 = vsel %vm120, -1e+30, %v121
    %v123 = vmul.f32 %v119, 0.33333334
    %v124 = vsel %vm120, -1e+30, %v123
    %v125 = vmax.f32 %v112, %v117
    %v126 = vmax.f32 %v113, %v122
    %v127 = vmax.f32 %v114, %v124
    %v128 = vsel %vm120, %v117, %v115
    %s129 = scalar_lea.vmem [#allocation2], 24
    %v130 = vld [vmem:[%s129] sm:$0xff]
    %s131 = scalar_lea.vmem [#allocation5], 24
    %v132 = vld [vmem:[%s131] sm:$0xff]
    %vm133 = vcmp.eq.s32.totalorder %v83, 3
    %v134 = vmul.f32 %v130, 0.33333334
    %v135 = vsel %vm133, -1e+30, %v134
    %v136 = vmul.f32 %v132, 0.33333334
    %v137 = vsel %vm133, -1e+30, %v136
    %v138 = vmax.f32 %v125, %v130
    %v139 = vmax.f32 %v126, %v135
    %v140 = vmax.f32 %v127, %v137
    %v141 = vsel %vm133, %v130, %v128
    %s142 = scalar_lea.vmem [#allocation2], 32
    %v143 = vld [vmem:[%s142] sm:$0xff]
    %s144 = scalar_lea.vmem [#allocation5], 32
    %v145 = vld [vmem:[%s144] sm:$0xff]
    %vm146 = vcmp.eq.s32.totalorder %v83, 4
    %v147 = vmul.f32 %v143, 0.33333334
    %v148 = vsel %vm146, -1e+30, %v147
    %v149 = vmul.f32 %v145, 0.33333334
    %v150 = vsel %vm146, -1e+30, %v149
    %v151 = vmax.f32 %v138, %v143
    %v152 = vmax.f32 %v139, %v148
    %v153 = vmax.f32 %v140, %v150
    %v154 = vsel %vm146, %v143, %v141
    %s155 = scalar_lea.vmem [#allocation2], 40
    %v156 = vld [vmem:[%s155] sm:$0xff]
    %s157 = scalar_lea.vmem [#allocation5], 40
    %v158 = vld [vmem:[%s157] sm:$0xff]
    %vm159 = vcmp.eq.s32.totalorder %v83, 5
    %v160 = vmul.f32 %v156, 0.33333334
    %v161 = vsel %vm159, -1e+30, %v160
    %v162 = vmul.f32 %v158, 0.33333334
    %v163 = vsel %vm159, -1e+30, %v162
    %v164 = vmax.f32 %v151, %v156
    %v165 = vmax.f32 %v152, %v161
    %v166 = vmax.f32 %v153, %v163
    %v167 = vsel %vm159, %v156, %v154
    %s168 = scalar_lea.vmem [#allocation2], 48
    %v169 = vld [vmem:[%s168] sm:$0xff]
    %s170 = scalar_lea.vmem [#allocation5], 48
    %v171 = vld [vmem:[%s170] sm:$0xff]
    %vm172 = vcmp.eq.s32.totalorder %v83, 6
    %v173 = vmul.f32 %v169, 0.33333334
    %v174 = vsel %vm172, -1e+30, %v173
    %v175 = vmul.f32 %v171, 0.33333334
    %v176 = vsel %vm172, -1e+30, %v175
    %v177 = vmax.f32 %v164, %v169
    %v178 = vmax.f32 %v165, %v174
    %v179 = vmax.f32 %v166, %v176
    %v180 = vsel %vm172, %v169, %v167
    %s181 = scalar_lea.vmem [#allocation2], 56
    %v182 = vld [vmem:[%s181] sm:$0xff]
    %s183 = scalar_lea.vmem [#allocation5], 56
    %v184 = vld [vmem:[%s183] sm:$0xff]
    %vm185 = vcmp.eq.s32.totalorder %v83, 7
    %v186 = vmul.f32 %v182, 0.33333334
    %v187 = vsel %vm185, -1e+30, %v186
    %v188 = vmul.f32 %v184, 0.33333334
    %v189 = vsel %vm185, -1e+30, %v188
    %v190 = vmax.f32 %v177, %v182
    %v191 = vmax.f32 %v178, %v187
    %v192 = vmax.f32 %v179, %v189
    %v193 = vsel %vm185, %v182, %v180
    %s194 = scalar_lea.vmem [#allocation2], 64
    %v195 = vld [vmem:[%s194] sm:$0xff]
    %s196 = scalar_lea.vmem [#allocation5], 64
    %v197 = vld [vmem:[%s196] sm:$0xff]
    %vm198 = vcmp.eq.s32.totalorder %v83, 8
    %v199 = vmul.f32 %v195, 0.33333334
    %v200 = vsel %vm198, -1e+30, %v199
    %v201 = vmul.f32 %v197, 0.33333334
    %v202 = vsel %vm198, -1e+30, %v201
    %v203 = vmax.f32 %v190, %v195
    %v204 = vmax.f32 %v191, %v200
    %v205 = vmax.f32 %v192, %v202
    %v206 = vsel %vm198, %v195, %v193
    %s207 = scalar_lea.vmem [#allocation2], 72
    %v208 = vld [vmem:[%s207] sm:$0xff]
    %s209 = scalar_lea.vmem [#allocation5], 72
    %v210 = vld [vmem:[%s209] sm:$0xff]
    %vm211 = vcmp.eq.s32.totalorder %v83, 9
    %v212 = vmul.f32 %v208, 0.33333334
    %v213 = vsel %vm211, -1e+30, %v212
    %v214 = vmul.f32 %v210, 0.33333334
    %v215 = vsel %vm211, -1e+30, %v214
    %v216 = vmax.f32 %v203, %v208
    %v217 = vmax.f32 %v204, %v213
    %v218 = vmax.f32 %v205, %v215
    %v219 = vsel %vm211, %v208, %v206
    %v220 = vsub.f32 %v95, %v216
    %v221 = vmul.f32 %v220, 1.442695
    %v222 = vpow.pop %v221
    %v223 = vsub.f32 %v99, %v217
    %v224 = vmul.f32 %v223, 1.442695
    %v225 = vpow.pop %v224
    %v226 = vsub.f32 %v101, %v218
    %v227 = vmul.f32 %v226, 1.442695
    %v228 = vpow.pop %v227
    %v229 = vsub.f32 %v101, %v99
    %v230 = vmul.f32 %v228, %v229
    %v231 = vsub.f32 %v104, %v216
    %v232 = vmul.f32 %v231, 1.442695
    %v233 = vpow.pop %v232
    %v234 = vsub.f32 %v109, %v217
    %v235 = vmul.f32 %v234, 1.442695
    %v236 = vpow.pop %v235
    %v237 = vsub.f32 %v111, %v218
    %v238 = vmul.f32 %v237, 1.442695
    %v239 = vpow.pop %v238
    %v240 = vsub.f32 %v111, %v109
    %v241 = vmul.f32 %v239, %v240
    %v242 = vadd.f32 %v222, %v233
    %v243 = vadd.f32 %v225, %v236
    %v244 = vadd.f32 %v228, %v239
    %v245 = vadd.f32 %v230, %v241
    %v246 = vsub.f32 %v117, %v216
    %v247 = vmul.f32 %v246, 1.442695
    %v248 = vpow.pop %v247
    %v249 = vsub.f32 %v122, %v217
    %v250 = vmul.f32 %v249, 1.442695
    %v251 = vpow.pop %v250
    %v252 = vsub.f32 %v124, %v218
    %v253 = vmul.f32 %v252, 1.442695
    %v254 = vpow.pop %v253
    %v255 = vsub.f32 %v124, %v122
    %v256 = vmul.f32 %v254, %v255
    %v257 = vadd.f32 %v242, %v248
    %v258 = vadd.f32 %v243, %v251
    %v259 = vadd.f32 %v244, %v254
    %v260 = vadd.f32 %v245, %v256
    %v261 = vsub.f32 %v130, %v216
    %v262 = vmul.f32 %v261, 1.442695
    %v263 = vpow.pop %v262
    %v264 = vsub.f32 %v135, %v217
    %v265 = vmul.f32 %v264, 1.442695
    %v266 = vpow.pop %v265
    %v267 = vsub.f32 %v137, %v218
    %v268 = vmul.f32 %v267, 1.442695
    %v269 = vpow.pop %v268
    %v270 = vsub.f32 %v137, %v135
    %v271 = vmul.f32 %v269, %v270
    %v272 = vadd.f32 %v257, %v263
    %v273 = vadd.f32 %v258, %v266
    %v274 = vadd.f32 %v259, %v269
    %v275 = vadd.f32 %v260, %v271
    %v276 = vsub.f32 %v143, %v216
    %v277 = vmul.f32 %v276, 1.442695
    %v278 = vpow.pop %v277
    %v279 = vsub.f32 %v148, %v217
    %v280 = vmul.f32 %v279, 1.442695
    %v281 = vpow.pop %v280
    %v282 = vsub.f32 %v150, %v218
    %v283 = vmul.f32 %v282, 1.442695
    %v284 = vpow.pop %v283
    %v285 = vsub.f32 %v150, %v148
    %v286 = vmul.f32 %v284, %v285
    %v287 = vadd.f32 %v272, %v278
    %v288 = vadd.f32 %v273, %v281
    %v289 = vadd.f32 %v274, %v284
    %v290 = vadd.f32 %v275, %v286
    %v291 = vsub.f32 %v156, %v216
    %v292 = vmul.f32 %v291, 1.442695
    %v293 = vpow.pop %v292
    %v294 = vsub.f32 %v161, %v217
    %v295 = vmul.f32 %v294, 1.442695
    %v296 = vpow.pop %v295
    %v297 = vsub.f32 %v163, %v218
    %v298 = vmul.f32 %v297, 1.442695
    %v299 = vpow.pop %v298
    %v300 = vsub.f32 %v163, %v161
    %v301 = vmul.f32 %v299, %v300
    %v302 = vadd.f32 %v287, %v293
    %v303 = vadd.f32 %v288, %v296
    %v304 = vadd.f32 %v289, %v299
    %v305 = vadd.f32 %v290, %v301
    %v306 = vsub.f32 %v169, %v216
    %v307 = vmul.f32 %v306, 1.442695
    %v308 = vpow.pop %v307
    %v309 = vsub.f32 %v174, %v217
    %v310 = vmul.f32 %v309, 1.442695
    %v311 = vpow.pop %v310
    %v312 = vsub.f32 %v176, %v218
    %v313 = vmul.f32 %v312, 1.442695
    %v314 = vpow.pop %v313
    %v315 = vsub.f32 %v176, %v174
    %v316 = vmul.f32 %v314, %v315
    %v317 = vadd.f32 %v302, %v308
    %v318 = vadd.f32 %v303, %v311
    %v319 = vadd.f32 %v304, %v314
    %v320 = vadd.f32 %v305, %v316
    %v321 = vsub.f32 %v182, %v216
    %v322 = vmul.f32 %v321, 1.442695
    %v323 = vpow.pop %v322
    %v324 = vsub.f32 %v187, %v217
    %v325 = vmul.f32 %v324, 1.442695
    %v326 = vpow.pop %v325
    %v327 = vsub.f32 %v189, %v218
    %v328 = vmul.f32 %v327, 1.442695
    %v329 = vpow.pop %v328
    %v330 = vsub.f32 %v189, %v187
    %v331 = vmul.f32 %v329, %v330
    %v332 = vadd.f32 %v317, %v323
    %v333 = vadd.f32 %v318, %v326
    %v334 = vadd.f32 %v319, %v329
    %v335 = vadd.f32 %v320, %v331
    %v336 = vsub.f32 %v195, %v216
    %v337 = vmul.f32 %v336, 1.442695
    %v338 = vpow.pop %v337
    %v339 = vsub.f32 %v200, %v217
    %v340 = vmul.f32 %v339, 1.442695
    %v341 = vpow.pop %v340
    %v342 = vsub.f32 %v202, %v218
    %v343 = vmul.f32 %v342, 1.442695
    %v344 = vpow.pop %v343
    %v345 = vsub.f32 %v202, %v200
    %v346 = vmul.f32 %v344, %v345
    %v347 = vadd.f32 %v332, %v338
    %v348 = vadd.f32 %v333, %v341
    %v349 = vadd.f32 %v334, %v344
    %v350 = vadd.f32 %v335, %v346
    %v351 = vsub.f32 %v208, %v216
    %v352 = vmul.f32 %v351, 1.442695
    %v353 = vpow.pop %v352
    %v354 = vsub.f32 %v213, %v217
    %v355 = vmul.f32 %v354, 1.442695
    %v356 = vpow.pop %v355
    %v357 = vsub.f32 %v215, %v218
    %v358 = vmul.f32 %v357, 1.442695
    %v359 = vpow.pop %v358
    %v360 = vsub.f32 %v215, %v213
    %v361 = vmul.f32 %v359, %v360
    %v362 = vadd.f32 %v347, %v353
    %v363 = vadd.f32 %v348, %v356
    %v364 = vadd.f32 %v349, %v359
    %v365 = vadd.f32 %v350, %v361
    %v366 = vlog2.pop %v362
    %v367 = vmul.f32 %v366, 0.6931472
    %v368 = vadd.f32 %v367, %v216
    %v369 = vsub.f32 %v368, %v219
    %v370 = vlog2.pop %v363
    %v371 = vmul.f32 %v370, 0.6931472
    %v372 = vadd.f32 %v371, %v217
    %v373 = vlog2.pop %v364
    %v374 = vmul.f32 %v373, 0.6931472
    %v375 = vadd.f32 %v374, %v218
    %v376 = vrcp.pop %v364
    %v377 = vmul.f32 %v365, %v376
    %v378 = vsub.f32 %v372, %v375
    %v379 = vadd.f32 %v377, %v378
    %v380 = vadd.f32 %v369, %v379
    %v381 = vsel %vm94, %v380, 0.0
    %v382 = vld [vmem:[#allocation8] sm:$0xff]
    %v383 = vadd.f32 %v382, %v381
    %384 = vst [vmem:[#allocation8] sm:$0xff] %v383
    // Predicated region
    $region30: #{tpu_custom_call.1} parent=1 // pred_check
      _
    $region31: #{tpu_custom_call.1} parent=1 // pred_check_branch
      %386 = sbr.rel (0) target = $region33
    $region32: #{tpu_custom_call.1} parent=1 // pred_region
      %s388 = ssub.s32 128, 128
      %389 = vsyncadd [#allocation4], %s388
      %s391 = sshll.u32 [#allocation8], 4
      %s392 = int_to_ptr.vmem [resolvable:$true] %s391
      %394 = dma.vmem_to_hbm [thread:$0]  %s392, 128, %s3, [#allocation4]
    $region33: #{tpu_custom_call.1} parent=1 // pred_fallthru
      _
    // Predicated region
    $region34: #{tpu_custom_call.1} parent=1 // pred_check
      _
    $region35: #{tpu_custom_call.1} parent=1 // pred_check_branch
      %396 = sbr.rel (0) target = $region37
    $region36: #{tpu_custom_call.1} parent=1 // pred_region
      %397 = dma.done [#allocation4], 128
    $region37: #{tpu_custom_call.1} parent=1 // pred_fallthru
      _
    %398 = vsyncpa [#allocation3], 1
    %399 = vsyncpa [#allocation6], 1
    %400 = vsyncpa [#allocation4], 1

</llo_original>
